<compile_context>
chip_gen: v7x
topology: tpu7x:2x2x1
jax: 0.10.0
libtpu: 0.0.40
codegen_flags: <defaults>
</compile_context>

<pallas_src>
import math

import jax
import jax.numpy as jnp
import numpy as np
from jax.experimental import pallas as pl
from jax.experimental.pallas import tpu as pltpu


def _bilinear_matrix(out_size: int, in_size: int, antialias: bool = True) -> np.ndarray:
    """(out_size, in_size) row-stochastic PIL-style bilinear interpolation matrix.

    Half-pixel centers; when downscaling with antialias=True, the triangle filter
    support widens by the scale factor (PIL / torchvision-antialias behaviour).
    """
    scale = in_size / out_size
    support = max(scale, 1.0) if antialias else 1.0
    mat = np.zeros((out_size, in_size), dtype=np.float64)
    for i in range(out_size):
        center = (i + 0.5) * scale
        lo = max(int(math.floor(center - support + 0.5)), 0)
        hi = min(int(math.floor(center + support + 0.5)), in_size)
        js = np.arange(lo, hi, dtype=np.float64)
        w = np.clip(1.0 - np.abs((js + 0.5 - center) / support), 0.0, None)
        s = w.sum()
        if s > 0.0:
            w /= s
        mat[i, lo:hi] = w
    return mat.astype(np.float32)


def _vmem_bytes_estimate(tc, h_in, w_in, h_out, w_out, compute_itemsize):
    """Conservative VMEM estimate for one grid step (per review: count scratch + temps)."""
    in_buf = 2 * tc * h_in * w_in * 1                              # uint8 input, 2x buffered
    out_buf = 2 * h_out * tc * w_out * 4                           # f32 output block, 2x buffered
    consts = 2 * (h_out * h_in + w_in * w_out) * compute_itemsize  # A_h / A_wt, 2x buffered
    slab = h_in * tc * w_out * compute_itemsize                    # scratch slab (height-pass input)
    img_cast = tc * h_in * w_in * compute_itemsize                 # cast of input block (live)
    width_res = tc * h_in * w_out * 4                              # width-pass f32 result (live)
    height_res = h_out * tc * w_out * 4                            # height-pass f32 result (live)
    return in_buf + out_buf + consts + slab + img_cast + width_res + height_res


def _vmem_defaults():
    """(vmem_limit_bytes, picker_budget_bytes) derived from the running chip."""
    cap = 64 * 1024 * 1024
    try:
        info = pltpu.get_tpu_info()
        cap = int(getattr(info, "vmem_capacity_bytes", cap)) or cap
    except Exception:
        pass
    if cap >= 96 * 1024 * 1024:
        limit = 96 * 1024 * 1024    # v5e / v6e: 128 MiB physical VMEM
    else:
        limit = 40 * 1024 * 1024    # v7x-class 64 MiB parts: leave spill/scratch headroom
    budget = limit - 8 * 1024 * 1024
    return limit, budget


def _pick_slices_per_step(n, h_in, w_in, h_out, w_out, compute_itemsize,
                          budget_bytes, cap=32, min_steps=4):
    """Largest divisor of n (<= cap) whose VMEM estimate fits the budget.

    Prefers choices leaving >= min_steps grid steps (>= 2 steps per v7x TensorCore so
    BlockSpec double-buffering actually overlaps DMA with compute), then >= 2, then any.
    """
    divisors = [d for d in range(1, min(n, cap) + 1) if n % d == 0]
    fits = [d for d in divisors
            if _vmem_bytes_estimate(d, h_in, w_in, h_out, w_out,
                                    compute_itemsize) <= budget_bytes]
    if not fits:
        return 1
    for steps in (min_steps, 2):
        multi = [d for d in fits if n // d >= steps]
        if multi:
            return max(multi)
    return max(fits)


def _is_v5e():
    try:
        kind = jax.devices()[0].device_kind.lower()
        return ("v5 lite" in kind) or ("v5e" in kind) or ("v5litepod" in kind)
    except Exception:
        return False


def _make_resize_kernel(tc, h_in, w_in, h_out, w_out, compute_dtype):
    itemsize = jnp.dtype(compute_dtype).itemsize
    # Merging (tc, H_in) -> tc*H_in on the cast value is layout-trivial only when H_in is
    # a multiple of the sublane packing (8 for f32, 16 for bf16); otherwise fall back to
    # per-plane width matmuls (the flat height matmul below is unaffected).
    sublane_pack = 32 // itemsize // 4 * 8 if itemsize == 4 else 16   # 8 (f32) / 16 (bf16)
    flat_width_pass = (h_in % sublane_pack == 0)
    inv255 = np.float32(1.0 / 255.0)

    def kernel(img_ref, ah_ref, awt_ref, out_ref, slab_ref):
        # img_ref : (tc, H_in, W_in)       uint8   -- tc (batch, channel) planes
        # ah_ref  : (H_out, H_in)          compute -- row interp matrix (pure weights)
        # awt_ref : (W_in, W_out)          compute -- column interp matrix (transposed)
        # out_ref : (1, H_out, tc*W_out)   f32     -- lane-dense output block
        # slab_ref: (H_in, tc*W_out)       compute -- VMEM scratch between the two passes
        img = img_ref[...].astype(compute_dtype)      # in-kernel uint8 -> compute dtype
        ah = ah_ref[...]
        awt = awt_ref[...]

        if flat_width_pass:
            # Width pass for ALL tc planes as one big MXU matmul.
            tmp = jnp.dot(img.reshape(tc * h_in, w_in), awt,
                          preferred_element_type=jnp.float32)        # (tc*H_in, W_out)
            tmp = tmp.astype(compute_dtype)
            # Rearrange plane-major rows into a lane-major slab (tc cheap VMEM copies,
            # no per-plane matmuls): slab[:, t*W_out:(t+1)*W_out] = tmp[t].
            for t in range(tc):
                slab_ref[:, t * w_out:(t + 1) * w_out] = tmp[t * h_in:(t + 1) * h_in, :]
        else:
            for t in range(tc):
                slab_ref[:, t * w_out:(t + 1) * w_out] = jnp.dot(
                    img[t], awt, preferred_element_type=jnp.float32
                ).astype(compute_dtype)

        # Height pass for ALL tc planes as ONE flat MXU matmul; output store is a single
        # lane-dense (H_out, tc*W_out) block. to_tensor's 1/255 is applied in f32 on the
        # f32 accumulator (kept out of the (possibly bf16) weights).
        res = jnp.dot(ah, slab_ref[...], preferred_element_type=jnp.float32)
        out_ref[0] = res * inv255

    return kernel


def collate_function(images_u8, labels, out_size, *,
                     slices_per_step=None, use_bf16_matmuls=None,
                     vmem_limit_bytes=None, min_steps=4):
    """images_u8: (B, H_in, W_in, C) uint8 NHWC.
    Returns ((B, C, H_out, W_out) float32 in [0, 1], labels)."""
    B, H_in, W_in, C = images_u8.shape
    H_out, W_out = out_size
    N = B * C

    if use_bf16_matmuls is None:
        use_bf16_matmuls = _is_v5e()        # v5e MXU is bf16-native; f32 is the slow path
    compute_dtype = jnp.bfloat16 if use_bf16_matmuls else jnp.float32
    itemsize = jnp.dtype(compute_dtype).itemsize

    default_limit, budget = _vmem_defaults()
    if vmem_limit_bytes is None:
        vmem_limit_bytes = default_limit

    # NHWC -> NCHW rearrangement in XLA at uint8 width (1 byte/elem). Per review this is
    # usually hidden behind the kernel's f32 writeback; keep it out of the kernel.
    imgs = jnp.transpose(images_u8, (0, 3, 1, 2)).reshape(N, H_in, W_in)

    # Host-built interpolation constants (pure weights; 1/255 is applied in-kernel in f32).
    a_h = jnp.asarray(_bilinear_matrix(H_out, H_in), dtype=compute_dtype)
    a_wt = jnp.asarray(_bilinear_matrix(W_out, W_in).T, dtype=compute_dtype)

    tc = slices_per_step or _pick_slices_per_step(
        N, H_in, W_in, H_out, W_out, itemsize, budget, min_steps=min_steps)
    assert N % tc == 0, "slices_per_step must divide B*C"
    G = N // tc

    out_blocks = pl.pallas_call(
        _make_resize_kernel(tc, H_in, W_in, H_out, W_out, compute_dtype),
        out_shape=jax.ShapeDtypeStruct((G, H_out, tc * W_out), jnp.float32),
        grid_spec=pltpu.PrefetchScalarGridSpec(
            num_scalar_prefetch=0,
            grid=(G,),
            in_specs=[
                pl.BlockSpec((tc, H_in, W_in), lambda i: (i, 0, 0)),
                # Constant-index blocks: DMA'd once and revisited every grid step.
                pl.BlockSpec((H_out, H_in), lambda i: (0, 0)),
                pl.BlockSpec((W_in, W_out), lambda i: (0, 0)),
            ],
            out_specs=pl.BlockSpec((1, H_out, tc * W_out), lambda i: (i, 0, 0)),
            scratch_shapes=[pltpu.VMEM((H_in, tc * W_out), compute_dtype)],
        ),
        compiler_params=pltpu.CompilerParams(
            dimension_semantics=("parallel",),
            vmem_limit_bytes=vmem_limit_bytes,
        ),
    )(imgs, a_h, a_wt)

    # Undo the lane-dense kernel layout with a cheap XLA reshape/transpose on the output.
    transformed = (out_blocks.reshape(G, H_out, tc, W_out)
                   .transpose(0, 2, 1, 3)
                   .reshape(B, C, H_out, W_out))
    return transformed, labels


if __name__ == "__main__":
    # Small shapes consistent with the module (scaled-down input_size=[256,192]).
    B, H_in, W_in, C = 2, 16, 12, 3
    OUT_SIZE = (24, 16)   # (H_out, W_out)

    key = jax.random.PRNGKey(0)
    images = jax.random.randint(key, (B, H_in, W_in, C), 0, 256,
                                dtype=jnp.int32).astype(jnp.uint8)
    labels = list(range(B))

    # Pure-JAX reference built from the same interpolation matrices (f32).
    a_h_ref = jnp.asarray(_bilinear_matrix(OUT_SIZE[0], H_in))
    a_w_ref = jnp.asarray(_bilinear_matrix(OUT_SIZE[1], W_in))
    imgs_f = jnp.transpose(images, (0, 3, 1, 2)).astype(jnp.float32)
    ref = jnp.einsum('oh,bchw,pw->bcop', a_h_ref, imgs_f, a_w_ref) / 255.0
    ref_np = np.asarray(ref)

    # 1) Auto tc, f32 compute (strict tolerance).
    transformed, out_labels = collate_function(images, labels, OUT_SIZE,
                                               use_bf16_matmuls=False)
    transformed = jax.block_until_ready(transformed)
    assert transformed.shape == (B, C, OUT_SIZE[0], OUT_SIZE[1])
    assert transformed.dtype == jnp.float32
    assert out_labels == labels
    np.testing.assert_allclose(np.asarray(transformed), ref_np, rtol=1e-5, atol=1e-5)

    # 2) Explicit tc > 1 (exercises the flat width pass + slab scatter + lane-dense store).
    t2, _ = collate_function(images, labels, OUT_SIZE, slices_per_step=3,
                             use_bf16_matmuls=False)
    t2 = jax.block_until_ready(t2)
    np.testing.assert_allclose(np.asarray(t2), ref_np, rtol=1e-5, atol=1e-5)

    # 3) bf16 matmul path (v5e-style); looser tolerance per the documented numerics.
    t3, _ = collate_function(images, labels, OUT_SIZE, slices_per_step=2,
                             use_bf16_matmuls=True)
    t3 = jax.block_until_ready(t3)
    np.testing.assert_allclose(np.asarray(t3), ref_np, rtol=0.0, atol=2e-2)

    # 4) H_in not a multiple of 8: exercises the per-plane width-pass fallback.
    H2 = 12
    images2 = jax.random.randint(jax.random.PRNGKey(0), (B, H2, W_in, C), 0, 256,
                                 dtype=jnp.int32).astype(jnp.uint8)
    a_h2 = jnp.asarray(_bilinear_matrix(OUT_SIZE[0], H2))
    ref2 = jnp.einsum('oh,bchw,pw->bcop', a_h2,
                      jnp.transpose(images2, (0, 3, 1, 2)).astype(jnp.float32),
                      a_w_ref) / 255.0
    t4, _ = collate_function(images2, labels, OUT_SIZE, slices_per_step=2,
                             use_bf16_matmuls=False)
    t4 = jax.block_until_ready(t4)
    np.testing.assert_allclose(np.asarray(t4), np.asarray(ref2), rtol=1e-5, atol=1e-5)

    print("KERNEL_OK")
</pallas_src>

<mosaic_0001>
module attributes {stable_mosaic.version = 11 : i64} {
  func.func @kernel(%arg0: i32, %arg1: memref<1x16x12xi8, #tpu.memory_space<vmem>>, %arg2: memref<24x16xf32, #tpu.memory_space<vmem>>, %arg3: memref<12x16xf32, #tpu.memory_space<vmem>>, %arg4: memref<1x24x16xf32, #tpu.memory_space<vmem>>, %arg5: memref<16x16xf32, #tpu.memory_space<vmem>>) attributes {dimension_semantics = [#tpu.dimension_semantics<parallel>], iteration_bounds = array<i64: 6>, scalar_prefetch = 0 : i64, scratch_operands = 1 : i64, tpu.core_type = #tpu.core_type<tc>, window_params = [{transform_indices = @transform_0, window_bounds = array<i64: 1, 16, 12>}, {pipeline_mode = #tpu.pipeline_mode<synchronous>, transform_indices = @transform_1, window_bounds = array<i64: 24, 16>}, {pipeline_mode = #tpu.pipeline_mode<synchronous>, transform_indices = @transform_2, window_bounds = array<i64: 12, 16>}, {transform_indices = @transform_3, window_bounds = array<i64: 1, 24, 16>}]} {
    %c0 = arith.constant 0 : index
    %c0_0 = arith.constant 0 : index
    %c0_1 = arith.constant 0 : index
    %0 = vector.load %arg1[%c0, %c0_0, %c0_1] : memref<1x16x12xi8, #tpu.memory_space<vmem>>, vector<1x16x12xi8>
    %1 = arith.uitofp %0 : vector<1x16x12xi8> to vector<1x16x12xf32>
    %c0_2 = arith.constant 0 : index
    %c0_3 = arith.constant 0 : index
    %2 = vector.load %arg2[%c0_2, %c0_3] : memref<24x16xf32, #tpu.memory_space<vmem>>, vector<24x16xf32>
    %c0_4 = arith.constant 0 : index
    %c0_5 = arith.constant 0 : index
    %3 = vector.load %arg3[%c0_4, %c0_5] : memref<12x16xf32, #tpu.memory_space<vmem>>, vector<12x16xf32>
    %4 = vector.shape_cast %1 : vector<1x16x12xf32> to vector<16x12xf32>
    %cst = arith.constant dense<0.000000e+00> : vector<16x16xf32>
    %5 = tpu.matmul %4, %3, %cst {dimension_numbers = #tpu.dot_dimension_numbers<[1], [0], [0], [1], [0, 0, 1, 1], [], []>} : vector<16x12xf32>, vector<12x16xf32>, vector<16x16xf32> -> vector<16x16xf32>
    %c0_6 = arith.constant 0 : index
    %c0_7 = arith.constant 0 : index
    %6 = vector.load %arg5[%c0_6, %c0_7] : memref<16x16xf32, #tpu.memory_space<vmem>>, vector<16x16xf32>
    tpu.vector_store %arg5[%c0_6, %c0_7], %5 {strides = array<i32>} : memref<16x16xf32, #tpu.memory_space<vmem>>, vector<16x16xf32>,
    %c0_8 = arith.constant 0 : index
    %c0_9 = arith.constant 0 : index
    %7 = vector.load %arg5[%c0_8, %c0_9] : memref<16x16xf32, #tpu.memory_space<vmem>>, vector<16x16xf32>
    %cst_10 = arith.constant dense<0.000000e+00> : vector<24x16xf32>
    %8 = tpu.matmul %2, %7, %cst_10 {dimension_numbers = #tpu.dot_dimension_numbers<[1], [0], [0], [1], [0, 0, 1, 1], [], []>} : vector<24x16xf32>, vector<16x16xf32>, vector<24x16xf32> -> vector<24x16xf32>
    %cst_11 = arith.constant 0.00392156886 : f32
    %9 = vector.broadcast %cst_11 : f32 to vector<24x16xf32>
    %10 = arith.mulf %8, %9 : vector<24x16xf32>
    %c0_12 = arith.constant 0 : index
    %c0_13 = arith.constant 0 : index
    %c0_14 = arith.constant 0 : index
    %11 = vector.load %arg4[%c0_12, %c0_13, %c0_14] : memref<1x24x16xf32, #tpu.memory_space<vmem>>, vector<1x24x16xf32>
    %12 = vector.shape_cast %11 : vector<1x24x16xf32> to vector<24x16xf32>
    %13 = vector.shape_cast %10 : vector<24x16xf32> to vector<1x24x16xf32>
    tpu.vector_store %arg4[%c0_12, %c0_13, %c0_14], %13 {strides = array<i32>} : memref<1x24x16xf32, #tpu.memory_space<vmem>>, vector<1x24x16xf32>,
    return
  }
  func.func @transform_0(%arg0: i32) -> (i32, i32, i32) {
    %c0_i32 = arith.constant 0 : i32
    %c0_i32_0 = arith.constant 0 : i32
    %c0_i32_1 = arith.constant 0 : i32
    return %arg0, %c0_i32, %c0_i32_0 : i32, i32, i32
  }
  func.func @transform_1(%arg0: i32) -> (i32, i32) {
    %c0_i32 = arith.constant 0 : i32
    %c0_i32_0 = arith.constant 0 : i32
    %c0_i32_1 = arith.constant 0 : i32
    return %c0_i32, %c0_i32_0 : i32, i32
  }
  func.func @transform_2(%arg0: i32) -> (i32, i32) {
    %c0_i32 = arith.constant 0 : i32
    %c0_i32_0 = arith.constant 0 : i32
    %c0_i32_1 = arith.constant 0 : i32
    return %c0_i32, %c0_i32_0 : i32, i32
  }
  func.func @transform_3(%arg0: i32) -> (i32, i32, i32) {
    %c0_i32 = arith.constant 0 : i32
    %c0_i32_0 = arith.constant 0 : i32
    %c0_i32_1 = arith.constant 0 : i32
    return %arg0, %c0_i32, %c0_i32_0 : i32, i32, i32
  }
}

</mosaic_0001>

<llo_original>
// kernel: tpu_custom_call.1
$region0: #{tpu_custom_call.1}
  #allocation0 [shape = 'u32[]', space=smem, size = 0x4, offset = 0x4, fixed_abs, tag = 'smem constant byte address 0x4 - core index']
  #allocation1 [shape = 'u32[144,128]{1,0:T(1,128)}', space=vmem, size = 0x12000, scoped, tag = 'internal scratch']
  #allocation2 [shape = 'f32[16,16]{1,0:T(8,128)}', space=vmem, size = 0x2000, scoped, tag = 'scratch operand']
  %s0 = inlined_call_operand.vmem [shape: u8[6,16,12], index: 0, kind: input, shape index: {}]
  %s1 = inlined_call_operand.vmem [shape: f32[24,16], index: 1, kind: input, shape index: {}]
  %s2 = inlined_call_operand.vmem [shape: f32[12,16], index: 2, kind: input, shape index: {}]
  %s3 = inlined_call_operand.vmem [shape: f32[6,24,16], index: 3, kind: output, shape index: {}]
  %s4 = sld [smem:[#allocation0]]
  $region45: #{tpu_custom_call.1} parent=0
    _
  %s6 = ssub.s32 1, %s4
  %s7 = scalar_select 0, %s6, %s4
  loop: start=0, step=1, limit=8
  $region2: #{tpu_custom_call.1} parent=0 // loop_pre_header
    _
  $region3: #{tpu_custom_call.1} parent=0 // loop_header
    %s9 = sphi 0, %s13
    %p10 = scmp.ge.s32.totalorder %s9, 8
    %s19 = sphi 0, %s21
    %s22 = sphi 0, %s19
    %s23 = sphi 0, %s22
    %s39 = sphi 0, %s23
    %s43 = sphi 0, %s43
    %s45 = sphi 0, %s43
    %s46 = sphi 0, %s45
    %s60 = sphi 0, %s46
    %s64 = sphi 0, %s64
    %s66 = sphi 0, %s64
    %s67 = sphi 0, %s66
    %s81 = sphi 0, %s67
    %s87 = sphi 0, %s89
    %s90 = sphi 0, %s87
    %s91 = sphi 0, %s90
    %s107 = sphi 0, %s91
  $region4: #{tpu_custom_call.1} parent=0 // loop_header_branch
    %12 = sbr.rel (%p10) target = $region8
  $region5: #{tpu_custom_call.1} parent=0 // loop_body
    %s14 = ssub.s32 %s9, 1
    %s15 = ssub.s32 %s9, 2
    %s16 = sadd.s32 %s9, 1
    %s17 = ssub.s32 %s9, %s16
    %p18 = scmp.eq.s32.totalorder %s17, 0
    %s20 = sadd.s32 %s19, 1
    %s21 = scalar_select %p18, %s19, %s20
    %p24 = pneg %p18
    %p25 = scmp.eq.s32.totalorder %s9, 5
    %p26 = por %p24, %p25
    %p27 = scmp.ne.s32.totalorder %s19, %s22
    %p28 = scmp.eq.s32.totalorder %s9, 0
    %p29 = por %p27, %p28
    %p30 = scmp.ne.s32.totalorder %s19, %s22
    %p31 = scmp.eq.s32.totalorder %s14, 5
    %p32 = por %p30, %p31
    %p33 = scmp.ne.s32.totalorder %s22, %s23
    %p34 = scmp.eq.s32.totalorder %s14, 0
    %p35 = por %p33, %p34
    %p36 = scmp.ne.s32.totalorder %s22, %s23
    %p37 = scmp.eq.s32.totalorder %s15, 5
    %p38 = por %p36, %p37
    %p40 = scmp.ne.s32.totalorder %s23, %s39
    %p41 = scmp.eq.s32.totalorder %s15, 0
    %p42 = por %p40, %p41
    %s44 = sadd.s32 %s43, 1
    %p47 = scmp.eq.s32.totalorder %s9, 5
    %p48 = scmp.ne.s32.totalorder %s43, %s45
    %p49 = scmp.eq.s32.totalorder %s9, 0
    %p50 = por %p48, %p49
    %p51 = scmp.ne.s32.totalorder %s43, %s45
    %p52 = scmp.eq.s32.totalorder %s14, 5
    %p53 = por %p51, %p52
    %p54 = scmp.ne.s32.totalorder %s45, %s46
    %p55 = scmp.eq.s32.totalorder %s14, 0
    %p56 = por %p54, %p55
    %p57 = scmp.ne.s32.totalorder %s45, %s46
    %p58 = scmp.eq.s32.totalorder %s15, 5
    %p59 = por %p57, %p58
    %p61 = scmp.ne.s32.totalorder %s46, %s60
    %p62 = scmp.eq.s32.totalorder %s15, 0
    %p63 = por %p61, %p62
    %s65 = sadd.s32 %s64, 1
    %p68 = scmp.eq.s32.totalorder %s9, 5
    %p69 = scmp.ne.s32.totalorder %s64, %s66
    %p70 = scmp.eq.s32.totalorder %s9, 0
    %p71 = por %p69, %p70
    %p72 = scmp.ne.s32.totalorder %s64, %s66
    %p73 = scmp.eq.s32.totalorder %s14, 5
    %p74 = por %p72, %p73
    %p75 = scmp.ne.s32.totalorder %s66, %s67
    %p76 = scmp.eq.s32.totalorder %s14, 0
    %p77 = por %p75, %p76
    %p78 = scmp.ne.s32.totalorder %s66, %s67
    %p79 = scmp.eq.s32.totalorder %s15, 5
    %p80 = por %p78, %p79
    %p82 = scmp.ne.s32.totalorder %s67, %s81
    %p83 = scmp.eq.s32.totalorder %s15, 0
    %p84 = por %p82, %p83
    %s85 = ssub.s32 %s9, %s16
    %p86 = scmp.eq.s32.totalorder %s85, 0
    %s88 = sadd.s32 %s87, 1
    %s89 = scalar_select %p86, %s87, %s88
    %p92 = pneg %p86
    %p93 = scmp.eq.s32.totalorder %s9, 5
    %p94 = por %p92, %p93
    %p95 = scmp.ne.s32.totalorder %s87, %s90
    %p96 = scmp.eq.s32.totalorder %s9, 0
    %p97 = por %p95, %p96
    %p98 = scmp.ne.s32.totalorder %s87, %s90
    %p99 = scmp.eq.s32.totalorder %s14, 5
    %p100 = por %p98, %p99
    %p101 = scmp.ne.s32.totalorder %s90, %s91
    %p102 = scmp.eq.s32.totalorder %s14, 0
    %p103 = por %p101, %p102
    %p104 = scmp.ne.s32.totalorder %s90, %s91
    %p105 = scmp.eq.s32.totalorder %s15, 5
    %p106 = por %p104, %p105
    %p108 = scmp.ne.s32.totalorder %s91, %s107
    %p109 = scmp.eq.s32.totalorder %s15, 0
    %p110 = por %p108, %p109
    %p111 = scmp.le.s32.totalorder 1, %s9
    %p112 = scmp.lt.s32.totalorder %s9, 7
    %p113 = pnand %p111, %p112
    %p114 = pneg %p113
    // Predicated region
    $region9: #{tpu_custom_call.1} parent=5 // pred_check
      _
    $region10: #{tpu_custom_call.1} parent=5 // pred_check_branch
      %116 = sbr.rel (%p113) target = $region12
    $region11: #{tpu_custom_call.1} parent=5 // pred_region
      %s117 = ssub.s32 %s9, 1
      // Predicated region
      $region13: #{tpu_custom_call.1} parent=11 // pred_check
        %p118 = pneg %p56
      $region14: #{tpu_custom_call.1} parent=11 // pred_check_branch
        %120 = sbr.rel (%p118) target = $region16
      $region15: #{tpu_custom_call.1} parent=11 // pred_region
        _
      $region16: #{tpu_custom_call.1} parent=11 // pred_fallthru
        _
      // Predicated region
      $region17: #{tpu_custom_call.1} parent=11 // pred_check
        %p121 = pneg %p77
      $region18: #{tpu_custom_call.1} parent=11 // pred_check_branch
        %123 = sbr.rel (%p121) target = $region20
      $region19: #{tpu_custom_call.1} parent=11 // pred_region
        _
      $region20: #{tpu_custom_call.1} parent=11 // pred_fallthru
        _
    $region12: #{tpu_custom_call.1} parent=5 // pred_fallthru
      _
    %p124 = scmp.lt.s32.totalorder %s9, 6
    // Predicated region
    $region21: #{tpu_custom_call.1} parent=5 // pred_check
      %p125 = pneg %p124
    $region22: #{tpu_custom_call.1} parent=5 // pred_check_branch
      %127 = sbr.rel (%p125) target = $region24
    $region23: #{tpu_custom_call.1} parent=5 // pred_region
      // Predicated region
      $region25: #{tpu_custom_call.1} parent=23 // pred_check
        %p128 = pneg %p29
      $region26: #{tpu_custom_call.1} parent=23 // pred_check_branch
        %130 = sbr.rel (%p128) target = $region28
      $region27: #{tpu_custom_call.1} parent=23 // pred_region
        %p131 = scmp.lt.s32.totalorder %s9, 5
        %s132 = scalar_select %p131, %s9, 5
        %s133 = smul.addr %s132, 2
        %s134 = smul.addr %s133, 2
        %s135 = scalar_lea.vmem %s0, %s134
      $region28: #{tpu_custom_call.1} parent=23 // pred_fallthru
        _
    $region24: #{tpu_custom_call.1} parent=5 // pred_fallthru
      _
    %p136 = scmp.le.s32.totalorder 1, %s9
    %p137 = scmp.lt.s32.totalorder %s9, 7
    %p138 = pnand %p136, %p137
    %p139 = pneg %p138
    // Predicated region
    $region29: #{tpu_custom_call.1} parent=5 // pred_check
      _
    $region30: #{tpu_custom_call.1} parent=5 // pred_check_branch
      %141 = sbr.rel (%p138) target = $region32
    $region31: #{tpu_custom_call.1} parent=5 // pred_region
      %s142 = ssub.s32 %s9, 1
      %p143 = scmp.lt.s32.totalorder %s14, 5
      %s144 = scalar_select %p143, %s14, 5
      %s145 = smul.addr %s144, 2
      %s146 = smul.addr %s145, 2
      %s147 = scalar_lea.vmem %s0, %s146
      %p148 = pneg %p35
      %p149 = pneg %p32
      %p150 = pneg %p56
      %p151 = pneg %p53
      %p152 = pneg %p77
      %p153 = pneg %p74
      %p154 = pneg %p103
      %p155 = pneg %p100
      %p156 = scmp.lt.s32.totalorder %s14, 5
      %s157 = scalar_select %p156, %s14, 5
      %s158 = smul.addr %s157, 3
      %s159 = smul.addr %s158, 8
      %s160 = scalar_lea.vmem %s3, %s159
      %p161 = scmp.lt.s32.totalorder %s14, 5
      %s162 = scalar_select %p161, %s14, 5
      %s163 = smul.addr %s162, 2
      %s164 = smul.addr %s163, 2
      %s165 = scalar_lea.vmem %s0, %s164
      %p166 = scmp.lt.s32.totalorder %s14, 5
      %s167 = scalar_select %p166, %s14, 5
      %s168 = smul.addr %s167, 3
      %s169 = smul.addr %s168, 8
      %s170 = scalar_lea.vmem %s3, %s169
      %v171 = vld [vmem:[%s165] sm:$0x3]
      %v172 = vld [vmem:[%s165 + $0x2] sm:$0x3]
      %v173 = vunpack.c.0.s8 %v171
      %v174 = vunpack.c.0.s8 %v172
      %v175 = vand.u32 %v173, 255
      %v176 = vand.u32 %v174, 255
      %v177 = vcvt.s32.f32 %v175
      %v178 = vcvt.s32.f32 %v176
      %v179 = vld [vmem:[%s1] sm:$0xff]
      %v180 = vld [vmem:[%s1 + $0x8] sm:$0xff]
      %v181 = vld [vmem:[%s1 + $0x10] sm:$0xff]
      %v182 = vld [vmem:[%s2] sm:$0xff]
      %v183 = vld [vmem:[%s2 + $0x8] sm:$0xf]
      %vm184 = vcmask 97280
      %v186 = vsel %vm184, %v177, 0
      %v189 = vsel %vm184, %v178, 0
      %vm191 = vcmask 1043456
      %v193 = vsel %vm191, %v183, 0
      %195 = vmatprep.subr.mxu0 0.0
      %196 = vmatpush1.msra.mxu0 %v182
      %197 = vmatprep.subr.mxu0 0.0
      %198 = vmatpush1.msra.mxu0 %v193
      %199 = vmatprep.subr.mxu0 0.0
      %200 = vmatpush1.msra.mxu0 0.0
      %201 = vmatprep.subr.mxu0 0.0
      %202 = vmatpush1.msra.mxu0 0.0
      %203 = vmatprep.subr.mxu0 0.0
      %204 = vmatpush1.msra.mxu0 0.0
      %205 = vmatprep.subr.mxu0 0.0
      %206 = vmatpush1.msra.mxu0 0.0
      %207 = vmatprep.subr.mxu0 0.0
      %208 = vmatpush1.msra.mxu0 0.0
      %209 = vmatprep.subr.mxu0 0.0
      %210 = vmatpush1.msra.mxu0 0.0
      %211 = vmatprep.subr.mxu0 0.0
      %212 = vmatpush1.msra.mxu0 0.0
      %213 = vmatprep.subr.mxu0 0.0
      %214 = vmatpush1.msra.mxu0 0.0
      %215 = vmatprep.subr.mxu0 0.0
      %216 = vmatpush1.msra.mxu0 0.0
      %217 = vmatprep.subr.mxu0 0.0
      %218 = vmatpush1.msra.mxu0 0.0
      %219 = vmatprep.subr.mxu0 0.0
      %220 = vmatpush1.msra.mxu0 0.0
      %221 = vmatprep.subr.mxu0 0.0
      %222 = vmatpush1.msra.mxu0 0.0
      %223 = vmatprep.subr.mxu0 0.0
      %224 = vmatpush1.msra.mxu0 0.0
      %225 = vmatprep.subr.mxu0 0.0
      %226 = vmatpush1.msra.mxu0 0.0
      %227 = vmatprep.subr.mxu0 0.0
      %228 = vmatpush1.msra.mxu0 0.0
      %229 = vmatprep.subr.mxu0 0.0
      %230 = vmatpush1.msra.mxu0 0.0
      %231 = vmatprep.subr.mxu0 0.0
      %232 = vmatpush1.msra.mxu0 0.0
      %233 = vmatprep.subr.mxu0 0.0
      %234 = vmatpush1.msra.mxu0 0.0
      %235 = vmatprep.subr.mxu0 0.0
      %236 = vmatpush1.msra.mxu0 0.0
      %237 = vmatprep.subr.mxu0 0.0
      %238 = vmatpush1.msra.mxu0 0.0
      %239 = vmatprep.subr.mxu0 0.0
      %240 = vmatpush1.msra.mxu0 0.0
      %241 = vmatprep.subr.mxu0 0.0
      %242 = vmatpush1.msra.mxu0 0.0
      %243 = vmatprep.subr.mxu0 0.0
      %244 = vmatpush1.msra.mxu0 0.0
      %245 = vmatprep.subr.mxu0 0.0
      %246 = vmatpush1.msra.mxu0 0.0
      %247 = vmatprep.subr.mxu0 0.0
      %248 = vmatpush1.msra.mxu0 0.0
      %249 = vmatprep.subr.mxu0 0.0
      %250 = vmatpush1.msra.mxu0 0.0
      %251 = vmatprep.subr.mxu0 0.0
      %252 = vmatpush1.msra.mxu0 0.0
      %253 = vmatprep.subr.mxu0 0.0
      %254 = vmatpush1.msra.mxu0 0.0
      %255 = vmatprep.subr.mxu0 0.0
      %256 = vmatpush1.msra.mxu0 0.0
      %257 = vmatprep.subr.mxu0 0.0
      %258 = vmatpush1.msra.mxu0 0.0
      %259 = vmatprep.mubr.f32.mxu0 0.0
      %260 = vmatmul.mubr.f32.gmra.mrb[0].mxu0 %v186
      %v261 = vpop.f32.mrb[0].mxu0
      %v262 = vadd.f32 0.0, %v261
      %v263 = vpop.f32.mrb[0].mxu0
      %264 = vmatprep.mubr.f32.mxu0 0.0
      %265 = vmatmul.mubr.f32.gmra.mrb[0].mxu0 %v189
      %v266 = vpop.f32.mrb[0].mxu0
      %v267 = vadd.f32 0.0, %v266
      %v268 = vpop.f32.mrb[0].mxu0
      %269 = vdwg.mxu0
      %vm270 = vcmask 130048
      %271 = vst.msk [vmem:[#allocation2] sm:$0xff] %vm270, %v262
      %272 = vst.msk [vmem:[#allocation2 + $0x8] sm:$0xff] %vm270, %v267
      %v273 = vld [vmem:[#allocation2] sm:$0xff]
      %v274 = vld [vmem:[#allocation2 + $0x8] sm:$0xff]
      %v276 = vsel %vm270, %v179, 0
      %v279 = vsel %vm270, %v180, 0
      %v282 = vsel %vm270, %v181, 0
      %284 = vmatprep.subr.mxu0 0.0
      %285 = vmatpush1.msra.mxu0 %v273
      %286 = vmatprep.subr.mxu0 0.0
      %287 = vmatpush1.msra.mxu0 %v274
      %288 = vmatprep.subr.mxu0 0.0
      %289 = vmatpush1.msra.mxu0 0.0
      %290 = vmatprep.subr.mxu0 0.0
      %291 = vmatpush1.msra.mxu0 0.0
      %292 = vmatprep.subr.mxu0 0.0
      %293 = vmatpush1.msra.mxu0 0.0
      %294 = vmatprep.subr.mxu0 0.0
      %295 = vmatpush1.msra.mxu0 0.0
      %296 = vmatprep.subr.mxu0 0.0
      %297 = vmatpush1.msra.mxu0 0.0
      %298 = vmatprep.subr.mxu0 0.0
      %299 = vmatpush1.msra.mxu0 0.0
      %300 = vmatprep.subr.mxu0 0.0
      %301 = vmatpush1.msra.mxu0 0.0
      %302 = vmatprep.subr.mxu0 0.0
      %303 = vmatpush1.msra.mxu0 0.0
      %304 = vmatprep.subr.mxu0 0.0
      %305 = vmatpush1.msra.mxu0 0.0
      %306 = vmatprep.subr.mxu0 0.0
      %307 = vmatpush1.msra.mxu0 0.0
      %308 = vmatprep.subr.mxu0 0.0
      %309 = vmatpush1.msra.mxu0 0.0
      %310 = vmatprep.subr.mxu0 0.0
      %311 = vmatpush1.msra.mxu0 0.0
      %312 = vmatprep.subr.mxu0 0.0
      %313 = vmatpush1.msra.mxu0 0.0
      %314 = vmatprep.subr.mxu0 0.0
      %315 = vmatpush1.msra.mxu0 0.0
      %316 = vmatprep.subr.mxu0 0.0
      %317 = vmatpush1.msra.mxu0 0.0
      %318 = vmatprep.subr.mxu0 0.0
      %319 = vmatpush1.msra.mxu0 0.0
      %320 = vmatprep.subr.mxu0 0.0
      %321 = vmatpush1.msra.mxu0 0.0
      %322 = vmatprep.subr.mxu0 0.0
      %323 = vmatpush1.msra.mxu0 0.0
      %324 = vmatprep.subr.mxu0 0.0
      %325 = vmatpush1.msra.mxu0 0.0
      %326 = vmatprep.subr.mxu0 0.0
      %327 = vmatpush1.msra.mxu0 0.0
      %328 = vmatprep.subr.mxu0 0.0
      %329 = vmatpush1.msra.mxu0 0.0
      %330 = vmatprep.subr.mxu0 0.0
      %331 = vmatpush1.msra.mxu0 0.0
      %332 = vmatprep.subr.mxu0 0.0
      %333 = vmatpush1.msra.mxu0 0.0
      %334 = vmatprep.subr.mxu0 0.0
      %335 = vmatpush1.msra.mxu0 0.0
      %336 = vmatprep.subr.mxu0 0.0
      %337 = vmatpush1.msra.mxu0 0.0
      %338 = vmatprep.subr.mxu0 0.0
      %339 = vmatpush1.msra.mxu0 0.0
      %340 = vmatprep.subr.mxu0 0.0
      %341 = vmatpush1.msra.mxu0 0.0
      %342 = vmatprep.subr.mxu0 0.0
      %343 = vmatpush1.msra.mxu0 0.0
      %344 = vmatprep.subr.mxu0 0.0
      %345 = vmatpush1.msra.mxu0 0.0
      %346 = vmatprep.subr.mxu0 0.0
      %347 = vmatpush1.msra.mxu0 0.0
      %348 = vmatprep.mubr.f32.mxu0 0.0
      %349 = vmatmul.mubr.f32.gmra.mrb[0].mxu0 %v276
      %v350 = vpop.f32.mrb[0].mxu0
      %v351 = vadd.f32 0.0, %v350
      %v352 = vpop.f32.mrb[0].mxu0
      %353 = vmatprep.mubr.f32.mxu0 0.0
      %354 = vmatmul.mubr.f32.gmra.mrb[0].mxu0 %v279
      %v355 = vpop.f32.mrb[0].mxu0
      %v356 = vadd.f32 0.0, %v355
      %v357 = vpop.f32.mrb[0].mxu0
      %358 = vmatprep.mubr.f32.mxu0 0.0
      %359 = vmatmul.mubr.f32.gmra.mrb[0].mxu0 %v282
      %v360 = vpop.f32.mrb[0].mxu0
      %v361 = vadd.f32 0.0, %v360
      %v362 = vpop.f32.mrb[0].mxu0
      %363 = vdwg.mxu0
      %v364 = vmul.f32 %v351, 0.003921569
      %v365 = vmul.f32 %v356, 0.003921569
      %v366 = vmul.f32 %v361, 0.003921569
      %367 = vst.msk [vmem:[%s170] sm:$0xff] %vm270, %v364
      %368 = vst.msk [vmem:[%s170 + $0x8] sm:$0xff] %vm270, %v365
      %369 = vst.msk [vmem:[%s170 + $0x10] sm:$0xff] %vm270, %v366
      %p370 = scmp.lt.s32.totalorder %s14, 5
      %s371 = scalar_select %p370, %s14, 5
      %s372 = smul.addr %s371, 3
      %s373 = smul.addr %s372, 8
      %s374 = scalar_lea.vmem %s3, %s373
      // Predicated region
      $region33: #{tpu_custom_call.1} parent=31 // pred_check
        %p375 = pneg %p100
      $region34: #{tpu_custom_call.1} parent=31 // pred_check_branch
        %377 = sbr.rel (%p375) target = $region36
      $region35: #{tpu_custom_call.1} parent=31 // pred_region
        _
      $region36: #{tpu_custom_call.1} parent=31 // pred_fallthru
        _
    $region32: #{tpu_custom_call.1} parent=5 // pred_fallthru
      _
    %p378 = scmp.le.s32.totalorder 2, %s9
    // Predicated region
    $region37: #{tpu_custom_call.1} parent=5 // pred_check
      %p379 = pneg %p378
    $region38: #{tpu_custom_call.1} parent=5 // pred_check_branch
      %381 = sbr.rel (%p379) target = $region40
    $region39: #{tpu_custom_call.1} parent=5 // pred_region
      %s382 = ssub.s32 %s9, 2
      // Predicated region
      $region41: #{tpu_custom_call.1} parent=39 // pred_check
        %p383 = pneg %p106
      $region42: #{tpu_custom_call.1} parent=39 // pred_check_branch
        %385 = sbr.rel (%p383) target = $region44
      $region43: #{tpu_custom_call.1} parent=39 // pred_region
        %p386 = scmp.lt.s32.totalorder %s15, 5
        %s387 = scalar_select %p386, %s15, 5
        %s388 = smul.addr %s387, 3
        %s389 = smul.addr %s388, 8
        %s390 = scalar_lea.vmem %s3, %s389
      $region44: #{tpu_custom_call.1} parent=39 // pred_fallthru
        _
    $region40: #{tpu_custom_call.1} parent=5 // pred_fallthru
      _
  $region6: #{tpu_custom_call.1} parent=0 // loop_footer
    %s13 = sadd.s32 1, %s9
  $region7: #{tpu_custom_call.1} parent=0 // loop_footer_branch
    %8 = sbr.rel target = $region3
  $region8: #{tpu_custom_call.1} parent=0 // loop_exit
    _

</llo_original>
